<compile_context>
chip_gen: v7x
topology: tpu7x:2x2x1
jax: 0.10.0
libtpu: 0.0.40
codegen_flags: <defaults>
</compile_context>

<pallas_src>
import math
from functools import partial

import jax
import jax.numpy as jnp
from jax.experimental import pallas as pl
from jax.experimental.pallas import tpu as pltpu

# ---- problem sizes (small, consistent with the module's MLP structure) ----
B = 8          # batch size
X_DIM = 64     # input features
Y_DIM = 4      # number of classes (model.y_dim)
Z_DIM = 16     # latent dim
H_DIM = 32     # hidden dim

# ---- packed parameter slab layout (single HBM->VMEM DMA for all params) ----
R_WX = 0                                # rows 0:64   -> [cls_w1 | enc_w1x]   lanes 0:64
R_WS = R_WX + X_DIM                     # rows 64:88  -> [dec_w1z; enc_w1y; dec_w1y] lanes 0:32
R_WH = R_WS + Z_DIM + 2 * Y_DIM         # rows 88:120 -> [enc_wmulv | dec_w2 | cls_w2] lanes 0:100
R_B0 = R_WH + H_DIM                     # row 120     -> [cls_b1 | enc_b1 | enc_bmulv | dec_b1]
R_B1 = R_B0 + 1                         # row 121     -> [dec_b2 | cls_b2]
SLAB_ROWS = 128
SLAB_COLS = 128


def _vmem_specs(n):
    return [pl.BlockSpec(memory_space=pltpu.MemorySpace.VMEM) for _ in range(n)]


def _softplus(o):
    # stable softplus(o) = max(o,0) + log(1 + exp(-|o|)); exp(-|o|) in (0,1].
    return jnp.maximum(o, 0.0) + jnp.log(1.0 + jnp.exp(-jnp.abs(o)))


def _mxu(a, b):
    # bf16 MXU operands, f32 accumulation; elementwise math elsewhere stays f32.
    return jnp.dot(a.astype(jnp.bfloat16), b.astype(jnp.bfloat16),
                   preferred_element_type=jnp.float32)


def _bf16_round(w):
    # round-trip through bf16 so an f32 row-add matches a bf16 one-hot matmul exactly.
    return w.astype(jnp.bfloat16).astype(jnp.float32)


# --------------------------- fused Pallas kernels ----------------------------

def svi_unlabeled_kernel(x_ref, eps_ref, w_ref, out_ref, *, beta, prior_const):
    """Whole SVI.forward(x, y=None): classifier, stacked enumerated DGM pass,
    BCE+KL elbo, entropy weighting and the final scalar mean — one launch."""
    x = x_ref[...]                                    # [B, X] f32 (BCE target stays f32)
    eps = eps_ref[...]                                # [Y*B, Z], class-major rows

    # ---- static views into the packed parameter slab (zero-cost slicing) ----
    wx     = w_ref[R_WX:R_WX + X_DIM, 0:2 * H_DIM]                          # [X, 2H]
    dw1z   = w_ref[R_WS:R_WS + Z_DIM, 0:H_DIM]                              # [Z, H]
    ew1y   = _bf16_round(w_ref[R_WS + Z_DIM:R_WS + Z_DIM + Y_DIM, 0:H_DIM])             # [Y, H]
    dw1y   = _bf16_round(w_ref[R_WS + Z_DIM + Y_DIM:R_WS + Z_DIM + 2 * Y_DIM, 0:H_DIM])  # [Y, H]
    wmulv  = w_ref[R_WH:R_WH + H_DIM, 0:2 * Z_DIM]                          # [H, 2Z]
    dw2    = w_ref[R_WH:R_WH + H_DIM, 2 * Z_DIM:2 * Z_DIM + X_DIM]          # [H, X]
    cw2    = w_ref[R_WH:R_WH + H_DIM,
                   2 * Z_DIM + X_DIM:2 * Z_DIM + X_DIM + Y_DIM]             # [H, Y]
    cb1    = w_ref[R_B0:R_B0 + 1, 0:H_DIM]
    eb1    = w_ref[R_B0:R_B0 + 1, H_DIM:2 * H_DIM]
    ebmulv = w_ref[R_B0:R_B0 + 1, 2 * H_DIM:2 * H_DIM + 2 * Z_DIM]
    db1    = w_ref[R_B0:R_B0 + 1, 2 * H_DIM + 2 * Z_DIM:3 * H_DIM + 2 * Z_DIM]
    db2    = w_ref[R_B1:R_B1 + 1, 0:X_DIM]
    cb2    = w_ref[R_B1:R_B1 + 1, X_DIM:X_DIM + Y_DIM]

    # ---- fused classifier-L1 + encoder-x matmul (one MXU push on shared x) ----
    xw = _mxu(x, wx)                                  # [B, 2H]
    hc = jnp.maximum(xw[:, :H_DIM] + cb1, 0.0)        # classifier hidden
    hx = xw[:, H_DIM:] + eb1                          # encoder x-contribution + bias

    # ---- classifier q(y|x); entropy straight from the stabilized logits ----
    lg = _mxu(hc, cw2) + cb2                          # [B, Y]
    lg = lg - jnp.max(lg, axis=-1, keepdims=True)
    e = jnp.exp(lg)
    se = jnp.sum(e, axis=-1, keepdims=True)
    probs = e / se                                    # [B, Y]
    ent = jnp.log(se) - jnp.sum(probs * lg, axis=-1, keepdims=True)   # [B, 1]

    # ---- vectorized enumerated-class pass: all Y classes stacked to [Y*B, *] ----
    h3 = jnp.maximum(hx.reshape(1, B, H_DIM) + ew1y.reshape(Y_DIM, 1, H_DIM), 0.0)
    h_all = h3.reshape(Y_DIM * B, H_DIM)                               # [Y*B, H]
    mulv = _mxu(h_all, wmulv) + ebmulv                                 # [Y*B, 2Z]
    mu = mulv[:, :Z_DIM]
    lv = mulv[:, Z_DIM:]
    z = mu + jnp.exp(0.5 * lv) * eps                                   # [Y*B, Z]

    hz_pre = (_mxu(z, dw1z) + db1).reshape(Y_DIM, B, H_DIM) + dw1y.reshape(Y_DIM, 1, H_DIM)
    hz_all = jnp.maximum(hz_pre, 0.0).reshape(Y_DIM * B, H_DIM)        # [Y*B, H]
    o = _mxu(hz_all, dw2) + db2                                        # [Y*B, X] logits

    # ---- BCE from logits: elementwise softplus(o) - x*o; single big reduction ----
    sp = _softplus(o)
    o_csum = jnp.sum(o.reshape(Y_DIM, B, X_DIM), axis=0)               # [B, X]
    bce_sum = jnp.sum(sp) - jnp.sum(x * o_csum)
    likelihood = -(bce_sum / float(Y_DIM * B * X_DIM))                 # scalar (mean red.)

    # ---- per-row MC KL = 0.5*(z^2 - lv - eps^2), weighted by q(y|x) ----
    kl_row = jnp.sum(0.5 * (z * z - lv - eps * eps), axis=-1, keepdims=True)   # [Y*B, 1]
    klw = jnp.zeros((B, 1), jnp.float32)
    for c in range(Y_DIM):                            # tiny Y-step FMA loop, no matmuls
        klw = klw + probs[:, c:c + 1] * kl_row[c * B:(c + 1) * B, :]

    # U = sum_c q_c * elbo_c + H(q); scalar terms factor out since sum_c q_c = 1.
    U = (likelihood + prior_const) - beta * klw + ent                  # [B, 1]
    # (1,1) VMEM output; SMEM scalar output is a possible further (tiny) cleanup.
    out_ref[...] = jnp.mean(U, axis=0, keepdims=True)


def svi_labeled_kernel(x_ref, y_ref, eps_ref, w_ref, out_ref, *, beta, prior_const):
    """SVI.forward(x, y) labeled branch: mean(-BCE + prior - beta*KL)."""
    x = x_ref[...]
    y = y_ref[...]
    eps = eps_ref[...]

    wx     = w_ref[R_WX:R_WX + X_DIM, 0:2 * H_DIM]
    dw1z   = w_ref[R_WS:R_WS + Z_DIM, 0:H_DIM]
    ew1y   = w_ref[R_WS + Z_DIM:R_WS + Z_DIM + Y_DIM, 0:H_DIM]
    dw1y   = w_ref[R_WS + Z_DIM + Y_DIM:R_WS + Z_DIM + 2 * Y_DIM, 0:H_DIM]
    wmulv  = w_ref[R_WH:R_WH + H_DIM, 0:2 * Z_DIM]
    dw2    = w_ref[R_WH:R_WH + H_DIM, 2 * Z_DIM:2 * Z_DIM + X_DIM]
    eb1    = w_ref[R_B0:R_B0 + 1, H_DIM:2 * H_DIM]
    ebmulv = w_ref[R_B0:R_B0 + 1, 2 * H_DIM:2 * H_DIM + 2 * Z_DIM]
    db1    = w_ref[R_B0:R_B0 + 1, 2 * H_DIM + 2 * Z_DIM:3 * H_DIM + 2 * Z_DIM]
    db2    = w_ref[R_B1:R_B1 + 1, 0:X_DIM]

    # one matmul for the x branch (classifier half rides along for free in the same
    # MXU push) and one fused matmul for both one-hot y branches.
    hx = _mxu(x, wx)[:, H_DIM:]                                        # [B, H]
    ycontrib = _mxu(y, jnp.concatenate([ew1y, dw1y], axis=1))          # [B, 2H]

    h = jnp.maximum(hx + ycontrib[:, :H_DIM] + eb1, 0.0)
    mulv = _mxu(h, wmulv) + ebmulv
    mu = mulv[:, :Z_DIM]
    lv = mulv[:, Z_DIM:]
    z = mu + jnp.exp(0.5 * lv) * eps
    hz = jnp.maximum(_mxu(z, dw1z) + ycontrib[:, H_DIM:] + db1, 0.0)
    o = _mxu(hz, dw2) + db2                                            # [B, X] logits

    sp = _softplus(o)
    likelihood = -((jnp.sum(sp) - jnp.sum(x * o)) / float(B * X_DIM))  # scalar
    prior = jnp.sum(y, axis=-1, keepdims=True) * prior_const           # [B, 1]
    kl = jnp.sum(0.5 * (z * z - lv - eps * eps), axis=-1, keepdims=True)
    elbo = likelihood + prior - beta * kl                              # [B, 1]
    out_ref[...] = jnp.mean(elbo, axis=0, keepdims=True)


# ------------------------------ SVI forward ----------------------------------

def svi_forward(params, x, eps_noise, y=None):
    """Mirrors SVI.forward with sampler mc=iw=1 (identity) and beta=repeat(1)."""
    beta = 1.0                                        # next(repeat(1))
    prior_const = math.log(1.0 / Y_DIM + 1e-8)        # -log_standard_categorical(one_hot)
    slab = params["slab"]

    if y is None:
        b = x.shape[0]
        kernel = partial(svi_unlabeled_kernel, beta=beta, prior_const=prior_const)
        u = pl.pallas_call(
            kernel,
            out_shape=jax.ShapeDtypeStruct((1, 1), jnp.float32),
            in_specs=_vmem_specs(3),
            out_specs=pl.BlockSpec(memory_space=pltpu.MemorySpace.VMEM),
        )(x, eps_noise[:Y_DIM * b], slab)
        return u[0, 0]

    kernel = partial(svi_labeled_kernel, beta=beta, prior_const=prior_const)
    u = pl.pallas_call(
        kernel,
        out_shape=jax.ShapeDtypeStruct((1, 1), jnp.float32),
        in_specs=_vmem_specs(4),
        out_specs=pl.BlockSpec(memory_space=pltpu.MemorySpace.VMEM),
    )(x, y, eps_noise[:x.shape[0]], slab)
    return u[0, 0]


# -------------------- pure-JAX reference (torch dataflow) --------------------

def _ref_svi(slab, x, eps, y=None):
    """Follows SVI.forward literally (enumerate/tile/view/transpose) as a check."""
    def mm(a, b):
        return jnp.dot(a.astype(jnp.bfloat16), b.astype(jnp.bfloat16),
                       preferred_element_type=jnp.float32)

    cls_w1 = slab[R_WX:R_WX + X_DIM, 0:H_DIM]
    enc_w1x = slab[R_WX:R_WX + X_DIM, H_DIM:2 * H_DIM]
    dec_w1z = slab[R_WS:R_WS + Z_DIM, 0:H_DIM]
    enc_w1y = slab[R_WS + Z_DIM:R_WS + Z_DIM + Y_DIM, 0:H_DIM]
    dec_w1y = slab[R_WS + Z_DIM + Y_DIM:R_WS + Z_DIM + 2 * Y_DIM, 0:H_DIM]
    enc_wmulv = slab[R_WH:R_WH + H_DIM, 0:2 * Z_DIM]
    dec_w2 = slab[R_WH:R_WH + H_DIM, 2 * Z_DIM:2 * Z_DIM + X_DIM]
    cls_w2 = slab[R_WH:R_WH + H_DIM, 2 * Z_DIM + X_DIM:2 * Z_DIM + X_DIM + Y_DIM]
    cls_b1 = slab[R_B0, 0:H_DIM]
    enc_b1 = slab[R_B0, H_DIM:2 * H_DIM]
    enc_bmulv = slab[R_B0, 2 * H_DIM:2 * H_DIM + 2 * Z_DIM]
    dec_b1 = slab[R_B0, 2 * H_DIM + 2 * Z_DIM:3 * H_DIM + 2 * Z_DIM]
    dec_b2 = slab[R_B1, 0:X_DIM]
    cls_b2 = slab[R_B1, X_DIM:X_DIM + Y_DIM]

    beta = 1.0
    prior_const = math.log(1.0 / Y_DIM + 1e-8)

    if y is None:
        bs = x.shape[0]
        ys = jnp.repeat(jnp.eye(Y_DIM, dtype=jnp.float32), bs, axis=0)   # class-major
        xs = jnp.tile(x, (Y_DIM, 1))
    else:
        ys, xs = y, x

    h = jax.nn.relu(mm(xs, enc_w1x) + mm(ys, enc_w1y) + enc_b1)
    mulv = mm(h, enc_wmulv) + enc_bmulv
    mu, lv = mulv[:, :Z_DIM], mulv[:, Z_DIM:]
    z = mu + jnp.exp(0.5 * lv) * eps
    kl = jnp.sum(0.5 * (z * z - lv - eps * eps), axis=-1)                # log q - log p
    hz = jax.nn.relu(mm(z, dec_w1z) + mm(ys, dec_w1y) + dec_b1)
    o = mm(hz, dec_w2) + dec_b2
    recon = jnp.clip(jax.nn.sigmoid(o), 1e-7, 1.0 - 1e-7)
    bce = -(xs * jnp.log(recon) + (1.0 - xs) * jnp.log1p(-recon))
    likelihood = -jnp.mean(bce)                                          # reduction='mean'
    prior = jnp.sum(ys, axis=-1) * prior_const
    elbo = likelihood + prior - beta * kl                                # [N]

    if y is not None:
        return jnp.mean(elbo)

    hc = jax.nn.relu(mm(x, cls_w1) + cls_b1)
    logits = jax.nn.softmax(mm(hc, cls_w2) + cls_b2, axis=-1)            # [B, Y]
    Lmat = elbo.reshape(Y_DIM, x.shape[0]).T                             # [B, Y]
    H_ent = -jnp.sum(logits * jnp.log(logits + 1e-8), axis=-1)
    U = jnp.sum(logits * Lmat, axis=-1) + H_ent
    return jnp.mean(U)


# ------------------------------ params / main --------------------------------

def init_params(key):
    ks = jax.random.split(key, 7)

    def lin(k, fin, fout):
        k1, k2 = jax.random.split(k)
        bound = 1.0 / math.sqrt(fin)
        w = jax.random.uniform(k1, (fin, fout), jnp.float32, -bound, bound)
        b = jax.random.uniform(k2, (fout,), jnp.float32, -bound, bound)
        return w, b

    # encoder first layer acts on concat([x, y]); split into x / y branches.
    enc_w1, enc_b1 = lin(ks[0], X_DIM + Y_DIM, H_DIM)
    enc_w1x, enc_w1y = enc_w1[:X_DIM], enc_w1[X_DIM:]
    # merged mu | log_var head: one [H, 2Z] matmul instead of two.
    wmu, bmu = lin(ks[1], H_DIM, Z_DIM)
    wlv, blv = lin(ks[2], H_DIM, Z_DIM)
    enc_wmulv = jnp.concatenate([wmu, wlv], axis=1)
    enc_bmulv = jnp.concatenate([bmu, blv], axis=0)
    # decoder first layer acts on concat([z, y]); split likewise.
    dec_w1, dec_b1 = lin(ks[3], Z_DIM + Y_DIM, H_DIM)
    dec_w1z, dec_w1y = dec_w1[:Z_DIM], dec_w1[Z_DIM:]
    dec_w2, dec_b2 = lin(ks[4], H_DIM, X_DIM)
    cls_w1, cls_b1 = lin(ks[5], X_DIM, H_DIM)
    cls_w2, cls_b2 = lin(ks[6], H_DIM, Y_DIM)

    # pack everything into one slab -> single parameter DMA per kernel launch.
    slab = jnp.zeros((SLAB_ROWS, SLAB_COLS), jnp.float32)
    slab = slab.at[R_WX:R_WX + X_DIM, 0:H_DIM].set(cls_w1)
    slab = slab.at[R_WX:R_WX + X_DIM, H_DIM:2 * H_DIM].set(enc_w1x)
    slab = slab.at[R_WS:R_WS + Z_DIM, 0:H_DIM].set(dec_w1z)
    slab = slab.at[R_WS + Z_DIM:R_WS + Z_DIM + Y_DIM, 0:H_DIM].set(enc_w1y)
    slab = slab.at[R_WS + Z_DIM + Y_DIM:R_WS + Z_DIM + 2 * Y_DIM, 0:H_DIM].set(dec_w1y)
    slab = slab.at[R_WH:R_WH + H_DIM, 0:2 * Z_DIM].set(enc_wmulv)
    slab = slab.at[R_WH:R_WH + H_DIM, 2 * Z_DIM:2 * Z_DIM + X_DIM].set(dec_w2)
    slab = slab.at[R_WH:R_WH + H_DIM,
                   2 * Z_DIM + X_DIM:2 * Z_DIM + X_DIM + Y_DIM].set(cls_w2)
    slab = slab.at[R_B0, 0:H_DIM].set(cls_b1)
    slab = slab.at[R_B0, H_DIM:2 * H_DIM].set(enc_b1)
    slab = slab.at[R_B0, 2 * H_DIM:2 * H_DIM + 2 * Z_DIM].set(enc_bmulv)
    slab = slab.at[R_B0, 2 * H_DIM + 2 * Z_DIM:3 * H_DIM + 2 * Z_DIM].set(dec_b1)
    slab = slab.at[R_B1, 0:X_DIM].set(dec_b2)
    slab = slab.at[R_B1, X_DIM:X_DIM + Y_DIM].set(cls_b2)
    return {"slab": slab}


if __name__ == "__main__":
    key = jax.random.PRNGKey(0)
    kp, kx, ke, ky = jax.random.split(key, 4)
    params = init_params(kp)
    # BCE targets must lie in [0, 1] (sigmoid decoder), so x ~ U[0,1].
    x = jax.random.uniform(kx, (B, X_DIM), jnp.float32)
    # Fixed Gaussian noise for the reparameterization trick (deterministic run),
    # class-major rows matching enumerate_discrete ordering.
    eps_noise = jax.random.normal(ke, (Y_DIM * B, Z_DIM), jnp.float32)

    # ---- unlabeled branch (the main SVI objective) ----
    u = jax.jit(svi_forward)(params, x, eps_noise)
    u = jax.block_until_ready(u)
    assert u.shape == () and u.dtype == jnp.float32
    assert bool(jnp.isfinite(u))
    u_ref = _ref_svi(params["slab"], x, eps_noise)
    assert bool(jnp.allclose(u, u_ref, rtol=2e-3, atol=2e-3)), (float(u), float(u_ref))

    # ---- labeled branch ----
    labels = jax.random.randint(ky, (B,), 0, Y_DIM)
    y_onehot = jax.nn.one_hot(labels, Y_DIM, dtype=jnp.float32)
    l = jax.jit(svi_forward)(params, x, eps_noise[:B], y_onehot)
    l = jax.block_until_ready(l)
    assert l.shape == () and bool(jnp.isfinite(l))
    l_ref = _ref_svi(params["slab"], x, eps_noise[:B], y_onehot)
    assert bool(jnp.allclose(l, l_ref, rtol=2e-3, atol=2e-3)), (float(l), float(l_ref))

    print("KERNEL_OK")
</pallas_src>

<mosaic_0001>
module attributes {stable_mosaic.version = 11 : i64} {
  func.func @svi_unlabeled_kernel(%arg0: memref<8x64xf32, #tpu.memory_space<vmem>>, %arg1: memref<32x16xf32, #tpu.memory_space<vmem>>, %arg2: memref<128x128xf32, #tpu.memory_space<vmem>>, %arg3: memref<1x1xf32, #tpu.memory_space<vmem>>) attributes {dimension_semantics = [], scalar_prefetch = 0 : i64, scratch_operands = 0 : i64, tpu.core_type = #tpu.core_type<tc>} {
    %c0 = arith.constant 0 : index
    %c0_0 = arith.constant 0 : index
    %0 = vector.load %arg0[%c0, %c0_0] : memref<8x64xf32, #tpu.memory_space<vmem>>, vector<8x64xf32>
    %c0_1 = arith.constant 0 : index
    %c0_2 = arith.constant 0 : index
    %1 = vector.load %arg1[%c0_1, %c0_2] : memref<32x16xf32, #tpu.memory_space<vmem>>, vector<32x16xf32>
    %c0_3 = arith.constant 0 : index
    %c0_4 = arith.constant 0 : index
    %2 = vector.load %arg2[%c0_3, %c0_4] : memref<128x128xf32, #tpu.memory_space<vmem>>, vector<64x64xf32>
    %c64 = arith.constant 64 : index
    %c0_5 = arith.constant 0 : index
    %3 = vector.load %arg2[%c64, %c0_5] : memref<128x128xf32, #tpu.memory_space<vmem>>, vector<16x32xf32>
    %c80 = arith.constant 80 : index
    %c0_6 = arith.constant 0 : index
    %4 = vector.load %arg2[%c80, %c0_6] : memref<128x128xf32, #tpu.memory_space<vmem>>, vector<4x32xf32>
    %5 = arith.truncf %4 : vector<4x32xf32> to vector<4x32xbf16>
    %6 = arith.extf %5 : vector<4x32xbf16> to vector<4x32xf32>
    %c84 = arith.constant 84 : index
    %c0_7 = arith.constant 0 : index
    %7 = vector.load %arg2[%c84, %c0_7] : memref<128x128xf32, #tpu.memory_space<vmem>>, vector<4x32xf32>
    %8 = arith.truncf %7 : vector<4x32xf32> to vector<4x32xbf16>
    %9 = arith.extf %8 : vector<4x32xbf16> to vector<4x32xf32>
    %c88 = arith.constant 88 : index
    %c0_8 = arith.constant 0 : index
    %10 = vector.load %arg2[%c88, %c0_8] : memref<128x128xf32, #tpu.memory_space<vmem>>, vector<32x32xf32>
    %c88_9 = arith.constant 88 : index
    %c32 = arith.constant 32 : index
    %11 = vector.load %arg2[%c88_9, %c32] : memref<128x128xf32, #tpu.memory_space<vmem>>, vector<32x64xf32>
    %c88_10 = arith.constant 88 : index
    %c96 = arith.constant 96 : index
    %12 = vector.load %arg2[%c88_10, %c96] : memref<128x128xf32, #tpu.memory_space<vmem>>, vector<32x4xf32>
    %c120 = arith.constant 120 : index
    %c0_11 = arith.constant 0 : index
    %13 = vector.load %arg2[%c120, %c0_11] : memref<128x128xf32, #tpu.memory_space<vmem>>, vector<1x32xf32>
    %c120_12 = arith.constant 120 : index
    %c32_13 = arith.constant 32 : index
    %14 = vector.load %arg2[%c120_12, %c32_13] : memref<128x128xf32, #tpu.memory_space<vmem>>, vector<1x32xf32>
    %c120_14 = arith.constant 120 : index
    %c64_15 = arith.constant 64 : index
    %15 = vector.load %arg2[%c120_14, %c64_15] : memref<128x128xf32, #tpu.memory_space<vmem>>, vector<1x32xf32>
    %c120_16 = arith.constant 120 : index
    %c96_17 = arith.constant 96 : index
    %16 = vector.load %arg2[%c120_16, %c96_17] : memref<128x128xf32, #tpu.memory_space<vmem>>, vector<1x32xf32>
    %c121 = arith.constant 121 : index
    %c0_18 = arith.constant 0 : index
    %17 = vector.load %arg2[%c121, %c0_18] : memref<128x128xf32, #tpu.memory_space<vmem>>, vector<1x64xf32>
    %c121_19 = arith.constant 121 : index
    %c64_20 = arith.constant 64 : index
    %18 = vector.load %arg2[%c121_19, %c64_20] : memref<128x128xf32, #tpu.memory_space<vmem>>, vector<1x4xf32>
    %19 = arith.truncf %0 : vector<8x64xf32> to vector<8x64xbf16>
    %20 = arith.truncf %2 : vector<64x64xf32> to vector<64x64xbf16>
    %cst = arith.constant dense<0.000000e+00> : vector<8x64xf32>
    %21 = tpu.matmul %19, %20, %cst {dimension_numbers = #tpu.dot_dimension_numbers<[1], [0], [0], [1], [0, 0, 1, 1], [], []>} : vector<8x64xbf16>, vector<64x64xbf16>, vector<8x64xf32> -> vector<8x64xf32>
    %22 = vector.extract_strided_slice %21 {offsets = [0, 0], sizes = [8, 32], strides = [1, 1]} : vector<8x64xf32> to vector<8x32xf32>
    %23 = vector.broadcast %13 : vector<1x32xf32> to vector<8x32xf32>
    %24 = arith.addf %22, %23 : vector<8x32xf32>
    %cst_21 = arith.constant 0.000000e+00 : f32
    %25 = vector.broadcast %cst_21 : f32 to vector<8x32xf32>
    %26 = arith.maximumf %24, %25 : vector<8x32xf32>
    %27 = vector.extract_strided_slice %21 {offsets = [0, 32], sizes = [8, 32], strides = [1, 1]} : vector<8x64xf32> to vector<8x32xf32>
    %28 = vector.broadcast %14 : vector<1x32xf32> to vector<8x32xf32>
    %29 = arith.addf %27, %28 : vector<8x32xf32>
    %30 = arith.truncf %26 : vector<8x32xf32> to vector<8x32xbf16>
    %31 = arith.truncf %12 : vector<32x4xf32> to vector<32x4xbf16>
    %cst_22 = arith.constant dense<0.000000e+00> : vector<8x4xf32>
    %32 = tpu.matmul %30, %31, %cst_22 {dimension_numbers = #tpu.dot_dimension_numbers<[1], [0], [0], [1], [0, 0, 1, 1], [], []>} : vector<8x32xbf16>, vector<32x4xbf16>, vector<8x4xf32> -> vector<8x4xf32>
    %33 = vector.broadcast %18 : vector<1x4xf32> to vector<8x4xf32>
    %34 = arith.addf %32, %33 : vector<8x4xf32>
    %cst_23 = arith.constant dense<0xFF800000> : vector<8xf32>
    %35 = vector.multi_reduction <maximumf>, %34, %cst_23 [1] : vector<8x4xf32> to vector<8xf32>
    %36 = vector.shape_cast %35 : vector<8xf32> to vector<8x1xf32>
    %37 = vector.broadcast %36 : vector<8x1xf32> to vector<8x4xf32>
    %38 = arith.subf %34, %37 : vector<8x4xf32>
    %39 = math.exp %38 : vector<8x4xf32>
    %cst_24 = arith.constant dense<0.000000e+00> : vector<8xf32>
    %40 = vector.multi_reduction <add>, %39, %cst_24 [1] : vector<8x4xf32> to vector<8xf32>
    %41 = vector.shape_cast %40 : vector<8xf32> to vector<8x1xf32>
    %42 = vector.broadcast %41 : vector<8x1xf32> to vector<8x4xf32>
    %43 = arith.divf %39, %42 : vector<8x4xf32>
    %44 = math.log %41 : vector<8x1xf32>
    %45 = arith.mulf %43, %38 : vector<8x4xf32>
    %cst_25 = arith.constant dense<0.000000e+00> : vector<8xf32>
    %46 = vector.multi_reduction <add>, %45, %cst_25 [1] : vector<8x4xf32> to vector<8xf32>
    %47 = vector.shape_cast %46 : vector<8xf32> to vector<8x1xf32>
    %48 = arith.subf %44, %47 : vector<8x1xf32>
    %49 = vector.shape_cast %29 : vector<8x32xf32> to vector<1x8x32xf32>
    %50 = vector.shape_cast %6 : vector<4x32xf32> to vector<4x1x32xf32>
    %51 = vector.broadcast %49 : vector<1x8x32xf32> to vector<4x8x32xf32>
    %52 = vector.broadcast %50 : vector<4x1x32xf32> to vector<4x8x32xf32>
    %53 = arith.addf %51, %52 : vector<4x8x32xf32>
    %cst_26 = arith.constant 0.000000e+00 : f32
    %54 = vector.broadcast %cst_26 : f32 to vector<4x8x32xf32>
    %55 = arith.maximumf %53, %54 : vector<4x8x32xf32>
    %56 = vector.shape_cast %55 : vector<4x8x32xf32> to vector<32x32xf32>
    %57 = arith.truncf %56 : vector<32x32xf32> to vector<32x32xbf16>
    %58 = arith.truncf %10 : vector<32x32xf32> to vector<32x32xbf16>
    %cst_27 = arith.constant dense<0.000000e+00> : vector<32x32xf32>
    %59 = tpu.matmul %57, %58, %cst_27 {dimension_numbers = #tpu.dot_dimension_numbers<[1], [0], [0], [1], [0, 0, 1, 1], [], []>} : vector<32x32xbf16>, vector<32x32xbf16>, vector<32x32xf32> -> vector<32x32xf32>
    %60 = vector.broadcast %15 : vector<1x32xf32> to vector<32x32xf32>
    %61 = arith.addf %59, %60 : vector<32x32xf32>
    %62 = vector.extract_strided_slice %61 {offsets = [0, 0], sizes = [32, 16], strides = [1, 1]} : vector<32x32xf32> to vector<32x16xf32>
    %63 = vector.extract_strided_slice %61 {offsets = [0, 16], sizes = [32, 16], strides = [1, 1]} : vector<32x32xf32> to vector<32x16xf32>
    %cst_28 = arith.constant 5.000000e-01 : f32
    %64 = vector.broadcast %cst_28 : f32 to vector<32x16xf32>
    %65 = arith.mulf %64, %63 : vector<32x16xf32>
    %66 = math.exp %65 : vector<32x16xf32>
    %67 = arith.mulf %66, %1 : vector<32x16xf32>
    %68 = arith.addf %62, %67 : vector<32x16xf32>
    %69 = arith.truncf %68 : vector<32x16xf32> to vector<32x16xbf16>
    %70 = arith.truncf %3 : vector<16x32xf32> to vector<16x32xbf16>
    %cst_29 = arith.constant dense<0.000000e+00> : vector<32x32xf32>
    %71 = tpu.matmul %69, %70, %cst_29 {dimension_numbers = #tpu.dot_dimension_numbers<[1], [0], [0], [1], [0, 0, 1, 1], [], []>} : vector<32x16xbf16>, vector<16x32xbf16>, vector<32x32xf32> -> vector<32x32xf32>
    %72 = vector.broadcast %16 : vector<1x32xf32> to vector<32x32xf32>
    %73 = arith.addf %71, %72 : vector<32x32xf32>
    %74 = vector.shape_cast %73 : vector<32x32xf32> to vector<4x8x32xf32>
    %75 = vector.shape_cast %9 : vector<4x32xf32> to vector<4x1x32xf32>
    %76 = vector.broadcast %75 : vector<4x1x32xf32> to vector<4x8x32xf32>
    %77 = arith.addf %74, %76 : vector<4x8x32xf32>
    %cst_30 = arith.constant 0.000000e+00 : f32
    %78 = vector.broadcast %cst_30 : f32 to vector<4x8x32xf32>
    %79 = arith.maximumf %77, %78 : vector<4x8x32xf32>
    %80 = vector.shape_cast %79 : vector<4x8x32xf32> to vector<32x32xf32>
    %81 = arith.truncf %80 : vector<32x32xf32> to vector<32x32xbf16>
    %82 = arith.truncf %11 : vector<32x64xf32> to vector<32x64xbf16>
    %cst_31 = arith.constant dense<0.000000e+00> : vector<32x64xf32>
    %83 = tpu.matmul %81, %82, %cst_31 {dimension_numbers = #tpu.dot_dimension_numbers<[1], [0], [0], [1], [0, 0, 1, 1], [], []>} : vector<32x32xbf16>, vector<32x64xbf16>, vector<32x64xf32> -> vector<32x64xf32>
    %84 = vector.broadcast %17 : vector<1x64xf32> to vector<32x64xf32>
    %85 = arith.addf %83, %84 : vector<32x64xf32>
    %cst_32 = arith.constant 0.000000e+00 : f32
    %86 = vector.broadcast %cst_32 : f32 to vector<32x64xf32>
    %87 = arith.maximumf %85, %86 : vector<32x64xf32>
    %88 = math.absf %85 : vector<32x64xf32>
    %cst_33 = arith.constant 0.000000e+00 : f32
    %89 = vector.broadcast %cst_33 : f32 to vector<32x64xf32>
    %90 = arith.subf %89, %88 : vector<32x64xf32>
    %91 = math.exp %90 : vector<32x64xf32>
    %cst_34 = arith.constant 1.000000e+00 : f32
    %92 = vector.broadcast %cst_34 : f32 to vector<32x64xf32>
    %93 = arith.addf %92, %91 : vector<32x64xf32>
    %94 = math.log %93 : vector<32x64xf32>
    %95 = arith.addf %87, %94 : vector<32x64xf32>
    %96 = vector.shape_cast %85 : vector<32x64xf32> to vector<4x8x64xf32>
    %cst_35 = arith.constant dense<0.000000e+00> : vector<8x64xf32>
    %97 = vector.multi_reduction <add>, %96, %cst_35 [0] : vector<4x8x64xf32> to vector<8x64xf32>
    %98 = vector.shape_cast %95 : vector<32x64xf32> to vector<1x32x64xf32>
    %cst_36 = arith.constant dense<0.000000e+00> : vector<1xf32>
    %99 = vector.multi_reduction <add>, %98, %cst_36 [1, 2] : vector<1x32x64xf32> to vector<1xf32>
    %100 = vector.shape_cast %99 : vector<1xf32> to vector<1x1x1xf32>
    %101 = vector.extract %100[0, 0, 0] : f32 from vector<1x1x1xf32>
    %102 = arith.mulf %0, %97 : vector<8x64xf32>
    %103 = vector.shape_cast %102 : vector<8x64xf32> to vector<1x8x64xf32>
    %cst_37 = arith.constant dense<0.000000e+00> : vector<1xf32>
    %104 = vector.multi_reduction <add>, %103, %cst_37 [1, 2] : vector<1x8x64xf32> to vector<1xf32>
    %105 = vector.shape_cast %104 : vector<1xf32> to vector<1x1x1xf32>
    %106 = vector.extract %105[0, 0, 0] : f32 from vector<1x1x1xf32>
    %107 = arith.subf %101, %106 : f32
    %cst_38 = arith.constant 2.048000e+03 : f32
    %108 = arith.divf %107, %cst_38 : f32
    %cst_39 = arith.constant 0.000000e+00 : f32
    %109 = arith.subf %cst_39, %108 : f32
    %110 = arith.mulf %68, %68 : vector<32x16xf32>
    %111 = arith.subf %110, %63 : vector<32x16xf32>
    %112 = arith.mulf %1, %1 : vector<32x16xf32>
    %113 = arith.subf %111, %112 : vector<32x16xf32>
    %cst_40 = arith.constant 5.000000e-01 : f32
    %114 = vector.broadcast %cst_40 : f32 to vector<32x16xf32>
    %115 = arith.mulf %114, %113 : vector<32x16xf32>
    %cst_41 = arith.constant dense<0.000000e+00> : vector<32xf32>
    %116 = vector.multi_reduction <add>, %115, %cst_41 [1] : vector<32x16xf32> to vector<32xf32>
    %117 = vector.shape_cast %116 : vector<32xf32> to vector<32x1xf32>
    %cst_42 = arith.constant 0.000000e+00 : f32
    %118 = vector.broadcast %cst_42 : f32 to vector<8x1xf32>
    %119 = vector.extract_strided_slice %43 {offsets = [0, 0], sizes = [8, 1], strides = [1, 1]} : vector<8x4xf32> to vector<8x1xf32>
    %120 = vector.extract_strided_slice %117 {offsets = [0, 0], sizes = [8, 1], strides = [1, 1]} : vector<32x1xf32> to vector<8x1xf32>
    %121 = arith.mulf %119, %120 : vector<8x1xf32>
    %122 = arith.addf %118, %121 : vector<8x1xf32>
    %123 = vector.extract_strided_slice %43 {offsets = [0, 1], sizes = [8, 1], strides = [1, 1]} : vector<8x4xf32> to vector<8x1xf32>
    %124 = vector.extract_strided_slice %117 {offsets = [8, 0], sizes = [8, 1], strides = [1, 1]} : vector<32x1xf32> to vector<8x1xf32>
    %125 = arith.mulf %123, %124 : vector<8x1xf32>
    %126 = arith.addf %122, %125 : vector<8x1xf32>
    %127 = vector.extract_strided_slice %43 {offsets = [0, 2], sizes = [8, 1], strides = [1, 1]} : vector<8x4xf32> to vector<8x1xf32>
    %128 = vector.extract_strided_slice %117 {offsets = [16, 0], sizes = [8, 1], strides = [1, 1]} : vector<32x1xf32> to vector<8x1xf32>
    %129 = arith.mulf %127, %128 : vector<8x1xf32>
    %130 = arith.addf %126, %129 : vector<8x1xf32>
    %131 = vector.extract_strided_slice %43 {offsets = [0, 3], sizes = [8, 1], strides = [1, 1]} : vector<8x4xf32> to vector<8x1xf32>
    %132 = vector.extract_strided_slice %117 {offsets = [24, 0], sizes = [8, 1], strides = [1, 1]} : vector<32x1xf32> to vector<8x1xf32>
    %133 = arith.mulf %131, %132 : vector<8x1xf32>
    %134 = arith.addf %130, %133 : vector<8x1xf32>
    %cst_43 = arith.constant -1.38629436 : f32
    %135 = arith.addf %109, %cst_43 : f32
    %cst_44 = arith.constant 1.000000e+00 : f32
    %136 = vector.broadcast %cst_44 : f32 to vector<8x1xf32>
    %137 = arith.mulf %136, %134 : vector<8x1xf32>
    %138 = vector.broadcast %135 : f32 to vector<8x1xf32>
    %139 = arith.subf %138, %137 : vector<8x1xf32>
    %140 = arith.addf %139, %48 : vector<8x1xf32>
    %cst_45 = arith.constant dense<0.000000e+00> : vector<1xf32>
    %141 = vector.multi_reduction <add>, %140, %cst_45 [0] : vector<8x1xf32> to vector<1xf32>
    %142 = vector.shape_cast %141 : vector<1xf32> to vector<1x1xf32>
    %cst_46 = arith.constant 8.000000e+00 : f32
    %143 = vector.broadcast %cst_46 : f32 to vector<1x1xf32>
    %144 = arith.divf %142, %143 : vector<1x1xf32>
    %c0_47 = arith.constant 0 : index
    %c0_48 = arith.constant 0 : index
    %145 = vector.load %arg3[%c0_47, %c0_48] : memref<1x1xf32, #tpu.memory_space<vmem>>, vector<1x1xf32>
    tpu.vector_store %arg3[%c0_47, %c0_48], %144 {strides = array<i32>} : memref<1x1xf32, #tpu.memory_space<vmem>>, vector<1x1xf32>,
    return
  }
}

</mosaic_0001>

<llo_original>
// kernel: svi_forward.1
$region0: #{svi_forward.1}
  #allocation0 [shape = 'u32[]', space=smem, size = 0x4, offset = 0x4, fixed_abs, tag = 'smem constant byte address 0x4 - core index']
  #allocation1 [shape = 'u32[144,128]{1,0:T(1,128)}', space=vmem, size = 0x12000, scoped, tag = 'internal scratch']
  %s0 = inlined_call_operand.vmem [shape: f32[8,64], index: 0, kind: input, shape index: {}]
  %s1 = inlined_call_operand.vmem [shape: f32[32,16], index: 1, kind: input, shape index: {}]
  %s2 = inlined_call_operand.hbm [shape: f32[128,128], index: 2, kind: input, shape index: {}]
  %s3 = inlined_call_operand.hbm [shape: f32[1,1], index: 3, kind: output, shape index: {}]
  %s4 = sld [smem:[#allocation0]]
  $region26: #{svi_forward.1} parent=0
    _
  %s6 = ssub.s32 1, %s4
  %s7 = scalar_select 0, %s6, %s4
  $region1: #{svi_forward.1} parent=0
    #allocation2 [shape = 'u8[65536]{0}', space=vmem, size = 0x10000, scoped, tag = 'input window, operand 2, single buffered']
    #allocation3 [shape = 's32[1]{0}', space=sflag, size = 0x4, scoped, tag = 'scoped memory for svi_forward.1']
    #allocation4 [shape = 's32[1]{0}', space=sflag, size = 0x4, scoped, tag = 'scoped memory for svi_forward.1']
    #allocation5 [shape = 'u8[512]{0}', space=vmem, size = 0x400, scoped, tag = 'output window, operand 0, single buffered']
    %8 = vsyncpa [#allocation3], 0
    %9 = vsyncpa [#allocation4], 0
    // Predicated region
    $region2: #{svi_forward.1} parent=1 // pred_check
      _
    $region3: #{svi_forward.1} parent=1 // pred_check_branch
      %11 = sbr.rel (0) target = $region5
    $region4: #{svi_forward.1} parent=1 // pred_region
      _
    $region5: #{svi_forward.1} parent=1 // pred_fallthru
      _
    // Predicated region
    $region6: #{svi_forward.1} parent=1 // pred_check
      _
    $region7: #{svi_forward.1} parent=1 // pred_check_branch
      %13 = sbr.rel (0) target = $region9
    $region8: #{svi_forward.1} parent=1 // pred_region
      _
    $region9: #{svi_forward.1} parent=1 // pred_fallthru
      _
    // Predicated region
    $region10: #{svi_forward.1} parent=1 // pred_check
      _
    $region11: #{svi_forward.1} parent=1 // pred_check_branch
      %15 = sbr.rel (0) target = $region13
    $region12: #{svi_forward.1} parent=1 // pred_region
      %s17 = ssub.s32 2048, 2048
      %18 = vsyncadd [#allocation3], %s17
      %s19 = sshll.u32 [#allocation2], 4
      %s20 = int_to_ptr.vmem [resolvable:$true] %s19
      %25 = dma.hbm_to_vmem [thread:$0]  %s2, 2048, %s20, [#allocation3], 128, 128, 8
    $region13: #{svi_forward.1} parent=1 // pred_fallthru
      _
    // Predicated region
    $region14: #{svi_forward.1} parent=1 // pred_check
      _
    $region15: #{svi_forward.1} parent=1 // pred_check_branch
      %27 = sbr.rel (0) target = $region17
    $region16: #{svi_forward.1} parent=1 // pred_region
      %28 = dma.done [#allocation3], 2048
    $region17: #{svi_forward.1} parent=1 // pred_fallthru
      _
    %v30 = vld [vmem:[%s0] sm:$0xff]
    %v31 = vld [vmem:[%s1] sm:$0xff]
    %v32 = vld [vmem:[%s1 + $0x8] sm:$0xff]
    %v33 = vld [vmem:[%s1 + $0x10] sm:$0xff]
    %v34 = vld [vmem:[%s1 + $0x18] sm:$0xff]
    %v35 = vld [vmem:[#allocation2] sm:$0xff]
    %v36 = vld [vmem:[#allocation2 + $0x8] sm:$0xff]
    %v37 = vld [vmem:[#allocation2 + $0x10] sm:$0xff]
    %v38 = vld [vmem:[#allocation2 + $0x18] sm:$0xff]
    %v39 = vld [vmem:[#allocation2 + $0x20] sm:$0xff]
    %v40 = vld [vmem:[#allocation2 + $0x28] sm:$0xff]
    %v41 = vld [vmem:[#allocation2 + $0x30] sm:$0xff]
    %v42 = vld [vmem:[#allocation2 + $0x38] sm:$0xff]
    %v43 = vld [vmem:[#allocation2 + $0x40] sm:$0xff]
    %v44 = vld [vmem:[#allocation2 + $0x48] sm:$0xff]
    %v45 = vld [vmem:[#allocation2 + $0x50] sm:$0xf]
    %v46 = vpack.c.bf16 %v45, %v45
    %v47 = vunpack.c.l.bf16 %v46
    %v48 = vld [vmem:[#allocation2 + $0x54] sm:$0xf]
    %v49 = vpack.c.bf16 %v48, %v48
    %v50 = vunpack.c.l.bf16 %v49
    %v51 = vld [vmem:[#allocation2 + $0x58] sm:$0xff]
    %v52 = vld [vmem:[#allocation2 + $0x60] sm:$0xff]
    %v53 = vld [vmem:[#allocation2 + $0x68] sm:$0xff]
    %v54 = vld [vmem:[#allocation2 + $0x70] sm:$0xff]
    %v55 = vld [vmem:[#allocation2 + $0x78] sm:$0x1]
    %v56 = vld [vmem:[#allocation2 + $0x79] sm:$0x1]
    %v57 = vpack.c.bf16 %v30, %v30
    %v58 = vpack.c.bf16 %v36, %v35
    %v59 = vpack.c.bf16 %v38, %v37
    %v60 = vpack.c.bf16 %v40, %v39
    %v61 = vpack.c.bf16 %v42, %v41
    %vm62 = vcmask 523264
    %v64 = vsel %vm62, %v57, 0
    %66 = vmatprep.subr.bf16.mxu0 0
    %67 = vmatpush1.bf16.msra.mxu0 %v58
    %68 = vmatprep.subr.bf16.mxu0 0
    %69 = vmatpush1.bf16.msra.mxu0 %v59
    %70 = vmatprep.subr.bf16.mxu0 0
    %71 = vmatpush1.bf16.msra.mxu0 %v60
    %72 = vmatprep.subr.bf16.mxu0 0
    %73 = vmatpush1.bf16.msra.mxu0 %v61
    %74 = vmatprep.subr.bf16.mxu0 0
    %75 = vmatpush1.bf16.msra.mxu0 0
    %76 = vmatprep.subr.bf16.mxu0 0
    %77 = vmatpush1.bf16.msra.mxu0 0
    %78 = vmatprep.subr.bf16.mxu0 0
    %79 = vmatpush1.bf16.msra.mxu0 0
    %80 = vmatprep.subr.bf16.mxu0 0
    %81 = vmatpush1.bf16.msra.mxu0 0
    %82 = vmatprep.subr.bf16.mxu0 0
    %83 = vmatpush1.bf16.msra.mxu0 0
    %84 = vmatprep.subr.bf16.mxu0 0
    %85 = vmatpush1.bf16.msra.mxu0 0
    %86 = vmatprep.subr.bf16.mxu0 0
    %87 = vmatpush1.bf16.msra.mxu0 0
    %88 = vmatprep.subr.bf16.mxu0 0
    %89 = vmatpush1.bf16.msra.mxu0 0
    %90 = vmatprep.subr.bf16.mxu0 0
    %91 = vmatpush1.bf16.msra.mxu0 0
    %92 = vmatprep.subr.bf16.mxu0 0
    %93 = vmatpush1.bf16.msra.mxu0 0
    %94 = vmatprep.subr.bf16.mxu0 0
    %95 = vmatpush1.bf16.msra.mxu0 0
    %96 = vmatprep.subr.bf16.mxu0 0
    %97 = vmatpush1.bf16.msra.mxu0 0
    %98 = vmatprep.mubr.bf16.mxu0 0
    %99 = vmatmul.mubr.bf16.gmra.mrb[0].mxu0 %v64
    %v100 = vpop.f32.mrb[0].mxu0
    %v101 = vadd.f32 0.0, %v100
    %v102 = vpop.f32.mrb[0].mxu0
    %v103 = vpop.f32.mrb[0].mxu0
    %v104 = vpop.f32.mrb[0].mxu0
    %105 = vdwg.mxu0
    %v106 = vlaneseq
    %v107 = vshrl.u32 %v106, 7
    %v108 = vsub.s32 0, %v107
    %v109 = vrot.slane %v55, %v108
    %v110 = vadd.f32 %v101, %v109
    %v111 = vmax.f32 %v110, 0.0
    %v112 = vpack.c.bf16 %v111, %v111
    %v113 = vpack.c.bf16 %v52, %v51
    %v114 = vpack.c.bf16 %v54, %v53
    %v115 = vlaneseq
    %v116 = vshrl.u32 %v115, 7
    %v117 = vsub.s32 0, %v116
    %v118 = vrot.slane %v56, %v117
    %121 = vrot.lane.b32.xlu0 %v113, 32
    %v122 = vpop.permute.xlu0 %121
    %123 = vrot.lane.b32.xlu0 %v114, 32
    %v124 = vpop.permute.xlu0 %123
    %128 = vrot.lane.b32.xlu0 %v118, 64
    %v129 = vpop.permute.xlu0 %128
    %vm131 = vcmask 261120
    %v133 = vsel %vm131, %v112, 0
    %135 = vmatprep.subr.bf16.mxu0 0
    %136 = vmatpush1.bf16.msra.mxu0 %v122
    %137 = vmatprep.subr.bf16.mxu0 0
    %138 = vmatpush1.bf16.msra.mxu0 %v124
    %139 = vmatprep.subr.bf16.mxu0 0
    %140 = vmatpush1.bf16.msra.mxu0 0
    %141 = vmatprep.subr.bf16.mxu0 0
    %142 = vmatpush1.bf16.msra.mxu0 0
    %143 = vmatprep.subr.bf16.mxu0 0
    %144 = vmatpush1.bf16.msra.mxu0 0
    %145 = vmatprep.subr.bf16.mxu0 0
    %146 = vmatpush1.bf16.msra.mxu0 0
    %147 = vmatprep.subr.bf16.mxu0 0
    %148 = vmatpush1.bf16.msra.mxu0 0
    %149 = vmatprep.subr.bf16.mxu0 0
    %150 = vmatpush1.bf16.msra.mxu0 0
    %151 = vmatprep.subr.bf16.mxu0 0
    %152 = vmatpush1.bf16.msra.mxu0 0
    %153 = vmatprep.subr.bf16.mxu0 0
    %154 = vmatpush1.bf16.msra.mxu0 0
    %155 = vmatprep.subr.bf16.mxu0 0
    %156 = vmatpush1.bf16.msra.mxu0 0
    %157 = vmatprep.subr.bf16.mxu0 0
    %158 = vmatpush1.bf16.msra.mxu0 0
    %159 = vmatprep.subr.bf16.mxu0 0
    %160 = vmatpush1.bf16.msra.mxu0 0
    %161 = vmatprep.subr.bf16.mxu0 0
    %162 = vmatpush1.bf16.msra.mxu0 0
    %163 = vmatprep.subr.bf16.mxu0 0
    %164 = vmatpush1.bf16.msra.mxu0 0
    %165 = vmatprep.subr.bf16.mxu0 0
    %166 = vmatpush1.bf16.msra.mxu0 0
    %167 = vmatprep.mubr.bf16.mxu0 0
    %168 = vmatmul.mubr.bf16.gmra.mrb[0].mxu0 %v133
    %v169 = vpop.f32.mrb[0].mxu0
    %v170 = vadd.f32 %v129, %v169
    %v171 = vpop.f32.mrb[0].mxu0
    %v172 = vpop.f32.mrb[0].mxu0
    %v173 = vpop.f32.mrb[0].mxu0
    %174 = vdwg.mxu0
    %vm175 = vcmask 31744
    %v176 = vsel %vm175, %v170, -inf
    %177 = vmax.xlane.f32.xlu0 %v176
    %v178 = vpop.xlane.xlu0 %177
    %v179 = vsub.f32 %v170, %v178
    %v180 = vmul.f32 %v179, 1.442695
    %v181 = vpow.pop %v180
    %v182 = vsel %vm175, %v181, 0.0
    %183 = vadd.xlane.f32.xlu0 %v182
    %v184 = vpop.xlane.xlu0 %183
    %v185 = vrcp.pop %v184
    %v186 = vmul.f32 %v181, %v185
    %v187 = vlog2.pop %v184
    %v188 = vmul.f32 %v187, 0.6931472
    %v189 = vmul.f32 %v186, %v179
    %v190 = vsel %vm175, %v189, 0.0
    %191 = vadd.xlane.f32.xlu0 %v190
    %v192 = vpop.xlane.xlu0 %191
    %v193 = vsub.f32 %v188, %v192
    %v196 = vunpack.c.l.s4 1966171168
    %v197 = vunpack.c.0.s8 %v196
    %v198 = vlaneseq
    %v199 = vshrl.u32 %v198, 7
    %v200 = vsub.s32 %v197, %v199
    %v201 = vrot.slane %v47, %v200
    %v202 = vcombine.high %v201, %v201
    %v204 = vunpack.c.l.s4 1966171168
    %v205 = vunpack.c.0.s8 %v204
    %v206 = vlaneseq
    %v207 = vshrl.u32 %v206, 7
    %v208 = vsub.s32 %v205, %v207
    %v209 = vrot.slane %v201, %v208
    %v211 = vunpack.c.l.s4 1966171168
    %v212 = vunpack.c.0.s8 %v211
    %v213 = vlaneseq
    %v214 = vshrl.u32 %v213, 7
    %v215 = vsub.s32 %v212, %v214
    %v216 = vrot.slane %v202, %v215
    %v217 = vcombine.high %v209, %v209
    %v218 = vcombine.high %v216, %v216
    %v219 = vlaneseq
    %v220 = vshrl.u32 %v219, 7
    %v221 = vsub.s32 0, %v220
    %v222 = vrot.slane %v209, %v221
    %v223 = vlaneseq
    %v224 = vshrl.u32 %v223, 7
    %v225 = vsub.s32 0, %v224
    %v226 = vrot.slane %v216, %v225
    %v227 = vlaneseq
    %v228 = vshrl.u32 %v227, 7
    %v229 = vsub.s32 0, %v228
    %v230 = vrot.slane %v217, %v229
    %v231 = vlaneseq
    %v232 = vshrl.u32 %v231, 7
    %v233 = vsub.s32 0, %v232
    %v234 = vrot.slane %v218, %v233
    %235 = vrot.lane.b32.xlu0 %v222, 32
    %v236 = vpop.permute.xlu0 %235
    %237 = vrot.lane.b32.xlu0 %v226, 32
    %v238 = vpop.permute.xlu0 %237
    %239 = vrot.lane.b32.xlu0 %v230, 32
    %v240 = vpop.permute.xlu0 %239
    %241 = vrot.lane.b32.xlu0 %v234, 32
    %v242 = vpop.permute.xlu0 %241
    %v247 = vadd.f32 %v110, %v236
    %v248 = vadd.f32 %v110, %v238
    %v249 = vadd.f32 %v110, %v240
    %v250 = vadd.f32 %v110, %v242
    %v251 = vmax.f32 %v247, 0.0
    %v252 = vmax.f32 %v248, 0.0
    %v253 = vmax.f32 %v249, 0.0
    %v254 = vmax.f32 %v250, 0.0
    %v255 = vpack.c.bf16 %v252, %v251
    %v256 = vpack.c.bf16 %v254, %v253
    %259 = vrot.lane.b32.xlu0 %v255, 96
    %v260 = vpop.permute.xlu0 %259
    %261 = vrot.lane.b32.xlu0 %v256, 96
    %v262 = vpop.permute.xlu0 %261
    %264 = vrot.lane.b32.xlu0 %v109, 64
    %v265 = vpop.permute.xlu0 %264
    %v268 = vsel %vm131, %v260, 0
    %v271 = vsel %vm131, %v262, 0
    %273 = vmatprep.subr.bf16.mxu0 0
    %274 = vmatpush1.bf16.msra.mxu0 %v113
    %275 = vmatprep.subr.bf16.mxu0 0
    %276 = vmatpush1.bf16.msra.mxu0 %v114
    %277 = vmatprep.subr.bf16.mxu0 0
    %278 = vmatpush1.bf16.msra.mxu0 0
    %279 = vmatprep.subr.bf16.mxu0 0
    %280 = vmatpush1.bf16.msra.mxu0 0
    %281 = vmatprep.subr.bf16.mxu0 0
    %282 = vmatpush1.bf16.msra.mxu0 0
    %283 = vmatprep.subr.bf16.mxu0 0
    %284 = vmatpush1.bf16.msra.mxu0 0
    %285 = vmatprep.subr.bf16.mxu0 0
    %286 = vmatpush1.bf16.msra.mxu0 0
    %287 = vmatprep.subr.bf16.mxu0 0
    %288 = vmatpush1.bf16.msra.mxu0 0
    %289 = vmatprep.subr.bf16.mxu0 0
    %290 = vmatpush1.bf16.msra.mxu0 0
    %291 = vmatprep.subr.bf16.mxu0 0
    %292 = vmatpush1.bf16.msra.mxu0 0
    %293 = vmatprep.subr.bf16.mxu0 0
    %294 = vmatpush1.bf16.msra.mxu0 0
    %295 = vmatprep.subr.bf16.mxu0 0
    %296 = vmatpush1.bf16.msra.mxu0 0
    %297 = vmatprep.subr.bf16.mxu0 0
    %298 = vmatpush1.bf16.msra.mxu0 0
    %299 = vmatprep.subr.bf16.mxu0 0
    %300 = vmatpush1.bf16.msra.mxu0 0
    %301 = vmatprep.subr.bf16.mxu0 0
    %302 = vmatpush1.bf16.msra.mxu0 0
    %303 = vmatprep.subr.bf16.mxu0 0
    %304 = vmatpush1.bf16.msra.mxu0 0
    %305 = vmatprep.mubr.bf16.mxu0 0
    %306 = vmatmul.mubr.bf16.gmra.mrb[0].mxu0 %v268
    %v307 = vpop.f32.mrb[0].mxu0
    %v308 = vadd.f32 %v265, %v307
    %v309 = vpop.f32.mrb[0].mxu0
    %v310 = vpop.f32.mrb[0].mxu0
    %v311 = vadd.f32 %v265, %v310
    %v312 = vpop.f32.mrb[0].mxu0
    %313 = vmatprep.mubr.bf16.mxu0 0
    %314 = vmatmul.mubr.bf16.gmra.mrb[0].mxu0 %v271
    %v315 = vpop.f32.mrb[0].mxu0
    %v316 = vadd.f32 %v265, %v315
    %v317 = vpop.f32.mrb[0].mxu0
    %v318 = vpop.f32.mrb[0].mxu0
    %v319 = vadd.f32 %v265, %v318
    %v320 = vpop.f32.mrb[0].mxu0
    %321 = vdwg.mxu0
    %v322 = vmul.f32 %v308, 0.5
    %v323 = vmul.f32 %v311, 0.5
    %v324 = vmul.f32 %v316, 0.5
    %v325 = vmul.f32 %v319, 0.5
    %v326 = vmul.f32 %v322, 1.442695
    %v327 = vpow.pop %v326
    %v328 = vmul.f32 %v323, 1.442695
    %v329 = vpow.pop %v328
    %v330 = vmul.f32 %v324, 1.442695
    %v331 = vpow.pop %v330
    %v332 = vmul.f32 %v325, 1.442695
    %v333 = vpow.pop %v332
    %338 = vrot.lane.b32.xlu0 %v31, 16
    %v339 = vpop.permute.xlu0 %338
    %340 = vrot.lane.b32.xlu0 %v32, 16
    %v341 = vpop.permute.xlu0 %340
    %342 = vrot.lane.b32.xlu0 %v33, 16
    %v343 = vpop.permute.xlu0 %342
    %344 = vrot.lane.b32.xlu0 %v34, 16
    %v345 = vpop.permute.xlu0 %344
    %v350 = vmul.f32 %v327, %v339
    %v351 = vmul.f32 %v329, %v341
    %v352 = vmul.f32 %v331, %v343
    %v353 = vmul.f32 %v333, %v345
    %358 = vrot.lane.b32.xlu0 %v350, 112
    %v359 = vpop.permute.xlu0 %358
    %360 = vrot.lane.b32.xlu0 %v351, 112
    %v361 = vpop.permute.xlu0 %360
    %362 = vrot.lane.b32.xlu0 %v352, 112
    %v363 = vpop.permute.xlu0 %362
    %364 = vrot.lane.b32.xlu0 %v353, 112
    %v365 = vpop.permute.xlu0 %364
    %v370 = vadd.f32 %v308, %v359
    %v371 = vadd.f32 %v311, %v361
    %v372 = vadd.f32 %v316, %v363
    %v373 = vadd.f32 %v319, %v365
    %v374 = vpack.c.bf16 %v371, %v370
    %v375 = vpack.c.bf16 %v373, %v372
    %v376 = vpack.c.bf16 %v44, %v43
    %377 = vrot.lane.b32.xlu0 %v109, 32
    %v378 = vpop.permute.xlu0 %377
    %vm380 = vcmask 130048
    %v382 = vsel %vm380, %v374, 0
    %v385 = vsel %vm380, %v375, 0
    %387 = vmatprep.subr.bf16.mxu0 0
    %388 = vmatpush1.bf16.msra.mxu0 %v376
    %389 = vmatprep.subr.bf16.mxu0 0
    %390 = vmatpush1.bf16.msra.mxu0 0
    %391 = vmatprep.subr.bf16.mxu0 0
    %392 = vmatpush1.bf16.msra.mxu0 0
    %393 = vmatprep.subr.bf16.mxu0 0
    %394 = vmatpush1.bf16.msra.mxu0 0
    %395 = vmatprep.subr.bf16.mxu0 0
    %396 = vmatpush1.bf16.msra.mxu0 0
    %397 = vmatprep.subr.bf16.mxu0 0
    %398 = vmatpush1.bf16.msra.mxu0 0
    %399 = vmatprep.subr.bf16.mxu0 0
    %400 = vmatpush1.bf16.msra.mxu0 0
    %401 = vmatprep.subr.bf16.mxu0 0
    %402 = vmatpush1.bf16.msra.mxu0 0
    %403 = vmatprep.subr.bf16.mxu0 0
    %404 = vmatpush1.bf16.msra.mxu0 0
    %405 = vmatprep.subr.bf16.mxu0 0
    %406 = vmatpush1.bf16.msra.mxu0 0
    %407 = vmatprep.subr.bf16.mxu0 0
    %408 = vmatpush1.bf16.msra.mxu0 0
    %409 = vmatprep.subr.bf16.mxu0 0
    %410 = vmatpush1.bf16.msra.mxu0 0
    %411 = vmatprep.subr.bf16.mxu0 0
    %412 = vmatpush1.bf16.msra.mxu0 0
    %413 = vmatprep.subr.bf16.mxu0 0
    %414 = vmatpush1.bf16.msra.mxu0 0
    %415 = vmatprep.subr.bf16.mxu0 0
    %416 = vmatpush1.bf16.msra.mxu0 0
    %417 = vmatprep.subr.bf16.mxu0 0
    %418 = vmatpush1.bf16.msra.mxu0 0
    %419 = vmatprep.mubr.bf16.mxu0 0
    %420 = vmatmul.mubr.bf16.gmra.mrb[0].mxu0 %v382
    %v421 = vpop.f32.mrb[0].mxu0
    %v422 = vadd.f32 %v378, %v421
    %v423 = vpop.f32.mrb[0].mxu0
    %v424 = vpop.f32.mrb[0].mxu0
    %v425 = vadd.f32 %v378, %v424
    %v426 = vpop.f32.mrb[0].mxu0
    %427 = vmatprep.mubr.bf16.mxu0 0
    %428 = vmatmul.mubr.bf16.gmra.mrb[0].mxu0 %v385
    %v429 = vpop.f32.mrb[0].mxu0
    %v430 = vadd.f32 %v378, %v429
    %v431 = vpop.f32.mrb[0].mxu0
    %v432 = vpop.f32.mrb[0].mxu0
    %v433 = vadd.f32 %v378, %v432
    %v434 = vpop.f32.mrb[0].mxu0
    %435 = vdwg.mxu0
    %v438 = vunpack.c.l.s4 1966171168
    %v439 = vunpack.c.0.s8 %v438
    %v440 = vlaneseq
    %v441 = vshrl.u32 %v440, 7
    %v442 = vsub.s32 %v439, %v441
    %v443 = vrot.slane %v50, %v442
    %v444 = vcombine.high %v443, %v443
    %v446 = vunpack.c.l.s4 1966171168
    %v447 = vunpack.c.0.s8 %v446
    %v448 = vlaneseq
    %v449 = vshrl.u32 %v448, 7
    %v450 = vsub.s32 %v447, %v449
    %v451 = vrot.slane %v443, %v450
    %v453 = vunpack.c.l.s4 1966171168
    %v454 = vunpack.c.0.s8 %v453
    %v455 = vlaneseq
    %v456 = vshrl.u32 %v455, 7
    %v457 = vsub.s32 %v454, %v456
    %v458 = vrot.slane %v444, %v457
    %v459 = vcombine.high %v451, %v451
    %v460 = vcombine.high %v458, %v458
    %v461 = vlaneseq
    %v462 = vshrl.u32 %v461, 7
    %v463 = vsub.s32 0, %v462
    %v464 = vrot.slane %v451, %v463
    %v465 = vlaneseq
    %v466 = vshrl.u32 %v465, 7
    %v467 = vsub.s32 0, %v466
    %v468 = vrot.slane %v458, %v467
    %v469 = vlaneseq
    %v470 = vshrl.u32 %v469, 7
    %v471 = vsub.s32 0, %v470
    %v472 = vrot.slane %v459, %v471
    %v473 = vlaneseq
    %v474 = vshrl.u32 %v473, 7
    %v475 = vsub.s32 0, %v474
    %v476 = vrot.slane %v460, %v475
    %v481 = vadd.f32 %v422, %v464
    %v482 = vadd.f32 %v425, %v468
    %v483 = vadd.f32 %v430, %v472
    %v484 = vadd.f32 %v433, %v476
    %v485 = vmax.f32 %v481, 0.0
    %v486 = vmax.f32 %v482, 0.0
    %v487 = vmax.f32 %v483, 0.0
    %v488 = vmax.f32 %v484, 0.0
    %v489 = vpack.c.bf16 %v486, %v485
    %v490 = vpack.c.bf16 %v488, %v487
    %491 = vrot.lane.b32.xlu0 %v113, 96
    %v492 = vpop.permute.xlu0 %491
    %493 = vrot.lane.b32.xlu0 %v114, 96
    %v494 = vpop.permute.xlu0 %493
    %v498 = vsel %vm131, %v489, 0
    %v501 = vsel %vm131, %v490, 0
    %503 = vmatprep.subr.bf16.mxu0 0
    %504 = vmatpush1.bf16.msra.mxu0 %v492
    %505 = vmatprep.subr.bf16.mxu0 0
    %506 = vmatpush1.bf16.msra.mxu0 %v494
    %507 = vmatprep.subr.bf16.mxu0 0
    %508 = vmatpush1.bf16.msra.mxu0 0
    %509 = vmatprep.subr.bf16.mxu0 0
    %510 = vmatpush1.bf16.msra.mxu0 0
    %511 = vmatprep.subr.bf16.mxu0 0
    %512 = vmatpush1.bf16.msra.mxu0 0
    %513 = vmatprep.subr.bf16.mxu0 0
    %514 = vmatpush1.bf16.msra.mxu0 0
    %515 = vmatprep.subr.bf16.mxu0 0
    %516 = vmatpush1.bf16.msra.mxu0 0
    %517 = vmatprep.subr.bf16.mxu0 0
    %518 = vmatpush1.bf16.msra.mxu0 0
    %519 = vmatprep.subr.bf16.mxu0 0
    %520 = vmatpush1.bf16.msra.mxu0 0
    %521 = vmatprep.subr.bf16.mxu0 0
    %522 = vmatpush1.bf16.msra.mxu0 0
    %523 = vmatprep.subr.bf16.mxu0 0
    %524 = vmatpush1.bf16.msra.mxu0 0
    %525 = vmatprep.subr.bf16.mxu0 0
    %526 = vmatpush1.bf16.msra.mxu0 0
    %527 = vmatprep.subr.bf16.mxu0 0
    %528 = vmatpush1.bf16.msra.mxu0 0
    %529 = vmatprep.subr.bf16.mxu0 0
    %530 = vmatpush1.bf16.msra.mxu0 0
    %531 = vmatprep.subr.bf16.mxu0 0
    %532 = vmatpush1.bf16.msra.mxu0 0
    %533 = vmatprep.subr.bf16.mxu0 0
    %534 = vmatpush1.bf16.msra.mxu0 0
    %535 = vmatprep.mubr.bf16.mxu0 0
    %536 = vmatmul.mubr.bf16.gmra.mrb[0].mxu0 %v498
    %v537 = vpop.f32.mrb[0].mxu0
    %v538 = vadd.f32 %v118, %v537
    %v539 = vpop.f32.mrb[0].mxu0
    %v540 = vpop.f32.mrb[0].mxu0
    %v541 = vadd.f32 %v118, %v540
    %v542 = vpop.f32.mrb[0].mxu0
    %543 = vmatprep.mubr.bf16.mxu0 0
    %544 = vmatmul.mubr.bf16.gmra.mrb[0].mxu0 %v501
    %v545 = vpop.f32.mrb[0].mxu0
    %v546 = vadd.f32 %v118, %v545
    %v547 = vpop.f32.mrb[0].mxu0
    %v548 = vpop.f32.mrb[0].mxu0
    %v549 = vadd.f32 %v118, %v548
    %v550 = vpop.f32.mrb[0].mxu0
    %551 = vdwg.mxu0
    %v552 = vmax.f32 %v538, 0.0
    %v553 = vmax.f32 %v541, 0.0
    %v554 = vmax.f32 %v546, 0.0
    %v555 = vmax.f32 %v549, 0.0
    %v556 = vand.u32 2147483647, %v538
    %v557 = vand.u32 2147483647, %v541
    %v558 = vand.u32 2147483647, %v546
    %v559 = vand.u32 2147483647, %v549
    %v560 = vsub.f32 0.0, %v556
    %v561 = vsub.f32 0.0, %v557
    %v562 = vsub.f32 0.0, %v558
    %v563 = vsub.f32 0.0, %v559
    %v564 = vmul.f32 %v560, 1.442695
    %v565 = vpow.pop %v564
    %v566 = vmul.f32 %v561, 1.442695
    %v567 = vpow.pop %v566
    %v568 = vmul.f32 %v562, 1.442695
    %v569 = vpow.pop %v568
    %v570 = vmul.f32 %v563, 1.442695
    %v571 = vpow.pop %v570
    %v572 = vadd.f32 %v565, 1.0
    %v573 = vadd.f32 %v567, 1.0
    %v574 = vadd.f32 %v569, 1.0
    %v575 = vadd.f32 %v571, 1.0
    %v576 = vlog2.pop %v572
    %v577 = vmul.f32 %v576, 0.6931472
    %v578 = vlog2.pop %v573
    %v579 = vmul.f32 %v578, 0.6931472
    %v580 = vlog2.pop %v574
    %v581 = vmul.f32 %v580, 0.6931472
    %v582 = vlog2.pop %v575
    %v583 = vmul.f32 %v582, 0.6931472
    %v584 = vadd.f32 %v552, %v577
    %v585 = vadd.f32 %v553, %v579
    %v586 = vadd.f32 %v554, %v581
    %v587 = vadd.f32 %v555, %v583
    %v588 = vsel %vm62, %v538, 0.0
    %v589 = vsel %vm62, %v541, 0.0
    %v590 = vadd.f32 %v588, %v589
    %v591 = vsel %vm62, %v546, 0.0
    %v592 = vadd.f32 %v590, %v591
    %v593 = vsel %vm62, %v549, 0.0
    %v594 = vadd.f32 %v592, %v593
    %v595 = vsel %vm62, %v584, 0.0
    %v596 = vsel %vm62, %v585, 0.0
    %v597 = vadd.f32 %v595, %v596
    %v598 = vsel %vm62, %v586, 0.0
    %v599 = vadd.f32 %v597, %v598
    %v600 = vsel %vm62, %v587, 0.0
    %v601 = vadd.f32 %v599, %v600
    %602 = vadd.xlane.f32.xlu0 %v601
    %v603 = vpop.xlane.xlu0 %602
    %v604 = vrot.slane %v603, 4
    %v605 = vadd.f32 %v603, %v604
    %v606 = vrot.slane %v605, 2
    %v607 = vadd.f32 %v605, %v606
    %v608 = vrot.slane %v607, 1
    %v609 = vadd.f32 %v607, %v608
    %s610 = vtos %v609
    %v611 = vmul.f32 %v30, %v594
    %v612 = vsel %vm62, %v611, 0.0
    %613 = vadd.xlane.f32.xlu0 %v612
    %v614 = vpop.xlane.xlu0 %613
    %v615 = vrot.slane %v614, 4
    %v616 = vadd.f32 %v614, %v615
    %v617 = vrot.slane %v616, 2
    %v618 = vadd.f32 %v616, %v617
    %v619 = vrot.slane %v618, 1
    %v620 = vadd.f32 %v618, %v619
    %s621 = vtos %v620
    %s622 = ssub.f32 %s610, %s621
    %v623 = vrcp.pop 2048.0
    %s624 = vtos %v623
    %s625 = smul.f32 %s622, %s624
    %s626 = ssub.f32 0.0, %s625
    %v627 = vmul.f32 %v370, %v370
    %v628 = vmul.f32 %v371, %v371
    %v629 = vmul.f32 %v372, %v372
    %v630 = vmul.f32 %v373, %v373
    %635 = vrot.lane.b32.xlu0 %v308, 112
    %v636 = vpop.permute.xlu0 %635
    %637 = vrot.lane.b32.xlu0 %v311, 112
    %v638 = vpop.permute.xlu0 %637
    %639 = vrot.lane.b32.xlu0 %v316, 112
    %v640 = vpop.permute.xlu0 %639
    %641 = vrot.lane.b32.xlu0 %v319, 112
    %v642 = vpop.permute.xlu0 %641
    %v647 = vsub.f32 %v627, %v636
    %v648 = vsub.f32 %v628, %v638
    %v649 = vsub.f32 %v629, %v640
    %v650 = vsub.f32 %v630, %v642
    %v651 = vmul.f32 %v31, %v31
    %v652 = vmul.f32 %v32, %v32
    %v653 = vmul.f32 %v33, %v33
    %v654 = vmul.f32 %v34, %v34
    %v655 = vsub.f32 %v647, %v651
    %v656 = vsub.f32 %v648, %v652
    %v657 = vsub.f32 %v649, %v653
    %v658 = vsub.f32 %v650, %v654
    %v659 = vmul.f32 %v655, 0.5
    %v660 = vmul.f32 %v656, 0.5
    %v661 = vmul.f32 %v657, 0.5
    %v662 = vmul.f32 %v658, 0.5
    %v663 = vsel %vm380, %v659, 0.0
    %664 = vadd.xlane.f32.xlu0 %v663
    %v665 = vpop.xlane.xlu0 %664
    %v666 = vsel %vm380, %v660, 0.0
    %667 = vadd.xlane.f32.xlu0 %v666
    %v668 = vpop.xlane.xlu0 %667
    %v669 = vsel %vm380, %v661, 0.0
    %670 = vadd.xlane.f32.xlu0 %v669
    %v671 = vpop.xlane.xlu0 %670
    %v672 = vsel %vm380, %v662, 0.0
    %673 = vadd.xlane.f32.xlu0 %v672
    %v674 = vpop.xlane.xlu0 %673
    %v675 = vmul.f32 %v186, %v665
    %v676 = vadd.f32 %v675, 0.0
    %v677 = vmul.f32 %v186, %v668
    %679 = vrot.lane.b32.xlu0 %v677, 127
    %v680 = vpop.permute.xlu0 %679
    %v682 = vadd.f32 %v676, %v680
    %v683 = vmul.f32 %v186, %v671
    %685 = vrot.lane.b32.xlu0 %v683, 126
    %v686 = vpop.permute.xlu0 %685
    %v688 = vadd.f32 %v682, %v686
    %v689 = vmul.f32 %v186, %v674
    %691 = vrot.lane.b32.xlu0 %v689, 125
    %v692 = vpop.permute.xlu0 %691
    %v694 = vadd.f32 %v688, %v692
    %s695 = sadd.f32 %s626, -1.3862944
    %v696 = vstv %s695
    %v697 = vsub.f32 %v696, %v694
    %v698 = vadd.f32 %v697, %v193
    %vm699 = vcmask 7168
    %v700 = vsel %vm699, %v698, 0.0
    %v701 = vrot.slane %v700, 4
    %v702 = vadd.f32 %v700, %v701
    %v703 = vrot.slane %v702, 2
    %v704 = vadd.f32 %v702, %v703
    %v705 = vrot.slane %v704, 1
    %v706 = vadd.f32 %v704, %v705
    %v707 = vrcp.pop 8.0
    %v708 = vmul.f32 %v706, %v707
    %vm709 = vcmask 0
    %710 = vst.msk [vmem:[#allocation5] sm:$0x1] %vm709, %v708
    // Predicated region
    $region18: #{svi_forward.1} parent=1 // pred_check
      _
    $region19: #{svi_forward.1} parent=1 // pred_check_branch
      %712 = sbr.rel (0) target = $region21
    $region20: #{svi_forward.1} parent=1 // pred_region
      %s714 = ssub.s32 16, 16
      %715 = vsyncadd [#allocation4], %s714
      %s717 = sshll.u32 [#allocation5], 4
      %s718 = int_to_ptr.vmem [resolvable:$true] %s717
      %720 = dma.vmem_to_hbm [thread:$0]  %s718, 16, %s3, [#allocation4]
    $region21: #{svi_forward.1} parent=1 // pred_fallthru
      _
    // Predicated region
    $region22: #{svi_forward.1} parent=1 // pred_check
      _
    $region23: #{svi_forward.1} parent=1 // pred_check_branch
      %722 = sbr.rel (0) target = $region25
    $region24: #{svi_forward.1} parent=1 // pred_region
      %723 = dma.done [#allocation4], 16
    $region25: #{svi_forward.1} parent=1 // pred_fallthru
      _
    %724 = vsyncpa [#allocation3], 1
    %725 = vsyncpa [#allocation4], 1

</llo_original>
